<compile_context>
chip_gen: v5e
topology: v5e:2x2
jax: 0.10.0
libtpu: 0.0.40
codegen_flags: <defaults>
</compile_context>

<pallas_src>
import jax
import jax.numpy as jnp
from jax.experimental import pallas as pl
from jax.experimental.pallas import tpu as pltpu


def _round_up(x, m):
    return ((x + m - 1) // m) * m


def _encoder_kernel(x_ref, w1_ref, b1_ref, w2_ref, b2_ref, w3_ref, b3_ref,
                    out_ref):
    # One batch tile per grid step; all weights/biases are VMEM-resident.
    x = x_ref[...]                                              # bf16 [TB, in]

    h1 = jnp.dot(x, w1_ref[...], preferred_element_type=jnp.float32)
    h1 = jnp.maximum(h1 + b1_ref[...], 0.0)                     # f32 bias + ReLU

    h2 = jnp.dot(h1.astype(jnp.bfloat16), w2_ref[...],
                 preferred_element_type=jnp.float32)
    h2 = jnp.maximum(h2 + b2_ref[...], 0.0)                     # f32 bias + ReLU

    out = jnp.dot(h2.astype(jnp.bfloat16), w3_ref[...],
                  preferred_element_type=jnp.float32)
    out = out + b3_ref[...]                                     # final Linear

    # Single lane-dense (128-multiple) write of the fused output tile.
    out_ref[...] = out.astype(out_ref.dtype)


def _choose_batch_tile(batch, hidden_max):
    """Pick a batch tile.

    Targets large tiles (amortize ~0.35 us/grid-step overhead), caps TB when the
    hidden dims make [TB, hidden] f32 intermediates large (vreg/VMEM pressure),
    prefers multiples of 128 (masked tail block), and keeps >= 2 grid steps for
    moderate batches so v7x can shard the batch axis across both TensorCores.
    """
    if hidden_max >= 2048:
        target = 128
    elif hidden_max >= 1024:
        target = 256
    else:
        target = 512

    if batch >= 2 * target:
        return target                       # >= 2 steps, 128-multiple tile

    half = -(-batch // 2)                   # ceil(batch / 2)
    if half >= 128:
        return _round_up(half, 128)         # 2 steps, 128-aligned
    tb = _round_up(half, 8)                 # f32 sublane alignment
    if tb >= batch:
        return max(8, _round_up(batch, 8))  # tiny batch: single tile
    return tb


def simple_encoder_forward(x, params, embedding_dim):
    """Run the SimpleEncoder forward pass as a Pallas TPU kernel.

    x: [batch, input_dim] float32
    params: dict with w1, b1, w2, b2, w3, b3 (weights pre-transposed [in, out]).
    Returns (mu, logvar), each [batch, embedding_dim].
    """
    batch, input_dim = x.shape
    h1_dim = params["w1"].shape[1]
    h2_dim = params["w2"].shape[1]
    out_dim = params["w3"].shape[1]          # == 2 * embedding_dim
    assert out_dim == 2 * embedding_dim

    # bf16 inputs / weights; accumulation, bias add and ReLU stay f32 in-kernel.
    xb = x.astype(jnp.bfloat16)
    w1 = params["w1"].astype(jnp.bfloat16)
    w2 = params["w2"].astype(jnp.bfloat16)
    w3 = params["w3"].astype(jnp.bfloat16)
    b1, b2, b3 = params["b1"], params["b2"], params["b3"]

    # Lane-dense output: pad the fused output dim to a multiple of 128 with
    # zero weight/bias columns so stores are full-lane vst (not masked vst.msk).
    out_dim_p = _round_up(out_dim, 128)
    if out_dim_p != out_dim:
        w3 = jnp.pad(w3, ((0, 0), (0, out_dim_p - out_dim)))
        b3 = jnp.pad(b3, ((0, 0), (0, out_dim_p - out_dim)))

    tb = _choose_batch_tile(batch, max(h1_dim, h2_dim))
    grid = (pl.cdiv(batch, tb),)

    # x / output tiled along batch; weights & biases map to a constant block so
    # they are DMA'd once and stay resident in VMEM across all grid steps.
    weight_bytes = (w1.size + w2.size + w3.size) * 2 + (b1.size + b2.size + b3.size) * 4
    single_buffer_weights = weight_bytes > (4 << 20)

    def _const_spec(shape):
        if single_buffer_weights:
            # Constant index_map -> DMA'd once; one buffer is enough (v7x VMEM).
            return pl.BlockSpec(shape, lambda i: (0, 0),
                                pipeline_mode=pl.Buffered(1))
        return pl.BlockSpec(shape, lambda i: (0, 0))

    x_spec = pl.BlockSpec((tb, input_dim), lambda i: (i, 0))
    w1_spec = _const_spec((input_dim, h1_dim))
    b1_spec = _const_spec((1, h1_dim))
    w2_spec = _const_spec((h1_dim, h2_dim))
    b2_spec = _const_spec((1, h2_dim))
    w3_spec = _const_spec((h2_dim, out_dim_p))
    b3_spec = _const_spec((1, out_dim_p))
    out_spec = pl.BlockSpec((tb, out_dim_p), lambda i: (i, 0))

    # Advisory cost estimate so XLA schedules this short custom call sensibly.
    flops = 2 * batch * (input_dim * h1_dim + h1_dim * h2_dim + h2_dim * out_dim_p)
    bytes_accessed = (xb.size * 2 + weight_bytes + batch * out_dim_p * 4)
    cost = pl.CostEstimate(flops=flops, transcendentals=0,
                           bytes_accessed=bytes_accessed)

    # Only raise the scoped VMEM limit when the footprint actually needs it
    # (keeps the default on v7x's smaller 64 MiB VMEM otherwise).
    weight_buf = (1 if single_buffer_weights else 2) * weight_bytes
    est_vmem = weight_buf + 2 * (tb * input_dim * 2 + tb * out_dim_p * 4)
    cp_kwargs = dict(dimension_semantics=("parallel",))
    if est_vmem > (24 << 20):
        cp_kwargs["vmem_limit_bytes"] = min(est_vmem + (8 << 20), 64 << 20)

    fused = pl.pallas_call(
        _encoder_kernel,
        out_shape=jax.ShapeDtypeStruct((batch, out_dim_p), x.dtype),
        grid=grid,
        in_specs=[x_spec, w1_spec, b1_spec, w2_spec, b2_spec, w3_spec, b3_spec],
        out_specs=out_spec,
        compiler_params=pltpu.CompilerParams(**cp_kwargs),
        cost_estimate=cost,
    )(xb, w1, b1, w2, b2, w3, b3)

    # Drop the zero-padded columns; torch.chunk(out, 2, dim=-1).
    mu = fused[:, :embedding_dim]
    logvar = fused[:, embedding_dim:out_dim]
    return mu, logvar


def init_params(key, input_dim, compress_dims, embedding_dim):
    """Deterministic parameter init (PyTorch Linear-style uniform fan-in)."""
    dims = [input_dim, *compress_dims]
    params = {}
    names = ["1", "2"]
    keys = jax.random.split(key, 2 * (len(compress_dims) + 1))
    ki = 0
    for name, (din, dout) in zip(names, zip(dims, dims[1:])):
        bound = 1.0 / float(jnp.sqrt(din))
        params[f"w{name}"] = jax.random.uniform(
            keys[ki], (din, dout), jnp.float32, -bound, bound)
        params[f"b{name}"] = jax.random.uniform(
            keys[ki + 1], (1, dout), jnp.float32, -bound, bound)
        ki += 2
    din, dout = compress_dims[-1], embedding_dim * 2
    bound = 1.0 / float(jnp.sqrt(din))
    params["w3"] = jax.random.uniform(keys[ki], (din, dout), jnp.float32, -bound, bound)
    params["b3"] = jax.random.uniform(keys[ki + 1], (1, dout), jnp.float32, -bound, bound)
    return params


def _reference_forward(x, params, embedding_dim):
    """Pure-JAX reference with the same bf16-input / f32-accumulate math."""
    xb = x.astype(jnp.bfloat16)
    w1 = params["w1"].astype(jnp.bfloat16)
    w2 = params["w2"].astype(jnp.bfloat16)
    w3 = params["w3"].astype(jnp.bfloat16)
    h = jnp.dot(xb, w1, preferred_element_type=jnp.float32) + params["b1"]
    h = jnp.maximum(h, 0.0).astype(jnp.bfloat16)
    h = jnp.dot(h, w2, preferred_element_type=jnp.float32) + params["b2"]
    h = jnp.maximum(h, 0.0).astype(jnp.bfloat16)
    o = jnp.dot(h, w3, preferred_element_type=jnp.float32) + params["b3"]
    return o[:, :embedding_dim], o[:, embedding_dim:]


if __name__ == "__main__":
    # Small shapes consistent with the module:
    #   input_dim=16, compress_dims=(32, 32), embedding_dim=8, batch=64
    # (batch=64 exercises the multi-step batch grid: tb=32 -> 2 grid steps)
    batch, input_dim, compress_dims, embedding_dim = 64, 16, (32, 32), 8

    key = jax.random.PRNGKey(0)
    key_x, key_p = jax.random.split(key)
    x = jax.random.normal(key_x, (batch, input_dim), dtype=jnp.float32)
    params = init_params(key_p, input_dim, compress_dims, embedding_dim)

    mu, logvar = simple_encoder_forward(x, params, embedding_dim)
    jax.block_until_ready((mu, logvar))

    mu_ref, logvar_ref = _reference_forward(x, params, embedding_dim)
    assert mu.shape == (batch, embedding_dim)
    assert logvar.shape == (batch, embedding_dim)
    assert jnp.allclose(mu, mu_ref, atol=1e-4, rtol=1e-4)
    assert jnp.allclose(logvar, logvar_ref, atol=1e-4, rtol=1e-4)

    print("KERNEL_OK")
</pallas_src>

<mosaic_0001>
module attributes {stable_mosaic.version = 11 : i64} {
  func.func @_encoder_kernel(%arg0: i32, %arg1: memref<32x16xbf16, #tpu.memory_space<vmem>>, %arg2: memref<16x32xbf16, #tpu.memory_space<vmem>>, %arg3: memref<1x32xf32, #tpu.memory_space<vmem>>, %arg4: memref<32x32xbf16, #tpu.memory_space<vmem>>, %arg5: memref<1x32xf32, #tpu.memory_space<vmem>>, %arg6: memref<32x128xbf16, #tpu.memory_space<vmem>>, %arg7: memref<1x128xf32, #tpu.memory_space<vmem>>, %arg8: memref<32x128xf32, #tpu.memory_space<vmem>>) attributes {dimension_semantics = [#tpu.dimension_semantics<parallel>], iteration_bounds = array<i64: 2>, scalar_prefetch = 0 : i64, scratch_operands = 0 : i64, tpu.core_type = #tpu.core_type<tc>, window_params = [{transform_indices = @transform_0, window_bounds = array<i64: 32, 16>}, {pipeline_mode = #tpu.pipeline_mode<synchronous>, transform_indices = @transform_1, window_bounds = array<i64: 16, 32>}, {pipeline_mode = #tpu.pipeline_mode<synchronous>, transform_indices = @transform_2, window_bounds = array<i64: 1, 32>}, {pipeline_mode = #tpu.pipeline_mode<synchronous>, transform_indices = @transform_3, window_bounds = array<i64: 32, 32>}, {pipeline_mode = #tpu.pipeline_mode<synchronous>, transform_indices = @transform_4, window_bounds = array<i64: 1, 32>}, {pipeline_mode = #tpu.pipeline_mode<synchronous>, transform_indices = @transform_5, window_bounds = array<i64: 32, 128>}, {pipeline_mode = #tpu.pipeline_mode<synchronous>, transform_indices = @transform_6, window_bounds = array<i64: 1, 128>}, {transform_indices = @transform_7, window_bounds = array<i64: 32, 128>}]} {
    %c0 = arith.constant 0 : index
    %c0_0 = arith.constant 0 : index
    %0 = vector.load %arg1[%c0, %c0_0] : memref<32x16xbf16, #tpu.memory_space<vmem>>, vector<32x16xbf16>
    %c0_1 = arith.constant 0 : index
    %c0_2 = arith.constant 0 : index
    %1 = vector.load %arg2[%c0_1, %c0_2] : memref<16x32xbf16, #tpu.memory_space<vmem>>, vector<16x32xbf16>
    %cst = arith.constant dense<0.000000e+00> : vector<32x32xf32>
    %2 = tpu.matmul %0, %1, %cst {dimension_numbers = #tpu.dot_dimension_numbers<[1], [0], [0], [1], [0, 0, 1, 1], [], []>} : vector<32x16xbf16>, vector<16x32xbf16>, vector<32x32xf32> -> vector<32x32xf32>
    %c0_3 = arith.constant 0 : index
    %c0_4 = arith.constant 0 : index
    %3 = vector.load %arg3[%c0_3, %c0_4] : memref<1x32xf32, #tpu.memory_space<vmem>>, vector<1x32xf32>
    %4 = vector.broadcast %3 : vector<1x32xf32> to vector<32x32xf32>
    %5 = arith.addf %2, %4 : vector<32x32xf32>
    %cst_5 = arith.constant 0.000000e+00 : f32
    %6 = vector.broadcast %cst_5 : f32 to vector<32x32xf32>
    %7 = arith.maximumf %5, %6 : vector<32x32xf32>
    %8 = arith.truncf %7 : vector<32x32xf32> to vector<32x32xbf16>
    %c0_6 = arith.constant 0 : index
    %c0_7 = arith.constant 0 : index
    %9 = vector.load %arg4[%c0_6, %c0_7] : memref<32x32xbf16, #tpu.memory_space<vmem>>, vector<32x32xbf16>
    %cst_8 = arith.constant dense<0.000000e+00> : vector<32x32xf32>
    %10 = tpu.matmul %8, %9, %cst_8 {dimension_numbers = #tpu.dot_dimension_numbers<[1], [0], [0], [1], [0, 0, 1, 1], [], []>} : vector<32x32xbf16>, vector<32x32xbf16>, vector<32x32xf32> -> vector<32x32xf32>
    %c0_9 = arith.constant 0 : index
    %c0_10 = arith.constant 0 : index
    %11 = vector.load %arg5[%c0_9, %c0_10] : memref<1x32xf32, #tpu.memory_space<vmem>>, vector<1x32xf32>
    %12 = vector.broadcast %11 : vector<1x32xf32> to vector<32x32xf32>
    %13 = arith.addf %10, %12 : vector<32x32xf32>
    %cst_11 = arith.constant 0.000000e+00 : f32
    %14 = vector.broadcast %cst_11 : f32 to vector<32x32xf32>
    %15 = arith.maximumf %13, %14 : vector<32x32xf32>
    %16 = arith.truncf %15 : vector<32x32xf32> to vector<32x32xbf16>
    %c0_12 = arith.constant 0 : index
    %c0_13 = arith.constant 0 : index
    %17 = vector.load %arg6[%c0_12, %c0_13] : memref<32x128xbf16, #tpu.memory_space<vmem>>, vector<32x128xbf16>
    %cst_14 = arith.constant dense<0.000000e+00> : vector<32x128xf32>
    %18 = tpu.matmul %16, %17, %cst_14 {dimension_numbers = #tpu.dot_dimension_numbers<[1], [0], [0], [1], [0, 0, 1, 1], [], []>} : vector<32x32xbf16>, vector<32x128xbf16>, vector<32x128xf32> -> vector<32x128xf32>
    %c0_15 = arith.constant 0 : index
    %c0_16 = arith.constant 0 : index
    %19 = vector.load %arg7[%c0_15, %c0_16] : memref<1x128xf32, #tpu.memory_space<vmem>>, vector<1x128xf32>
    %20 = vector.broadcast %19 : vector<1x128xf32> to vector<32x128xf32>
    %21 = arith.addf %18, %20 : vector<32x128xf32>
    %c0_17 = arith.constant 0 : index
    %c0_18 = arith.constant 0 : index
    %22 = vector.load %arg8[%c0_17, %c0_18] : memref<32x128xf32, #tpu.memory_space<vmem>>, vector<32x128xf32>
    tpu.vector_store %arg8[%c0_17, %c0_18], %21 {strides = array<i32>} : memref<32x128xf32, #tpu.memory_space<vmem>>, vector<32x128xf32>,
    return
  }
  func.func @transform_0(%arg0: i32) -> (i32, i32) {
    %c0_i32 = arith.constant 0 : i32
    %c0_i32_0 = arith.constant 0 : i32
    return %arg0, %c0_i32 : i32, i32
  }
  func.func @transform_1(%arg0: i32) -> (i32, i32) {
    %c0_i32 = arith.constant 0 : i32
    %c0_i32_0 = arith.constant 0 : i32
    %c0_i32_1 = arith.constant 0 : i32
    return %c0_i32, %c0_i32_0 : i32, i32
  }
  func.func @transform_2(%arg0: i32) -> (i32, i32) {
    %c0_i32 = arith.constant 0 : i32
    %c0_i32_0 = arith.constant 0 : i32
    %c0_i32_1 = arith.constant 0 : i32
    return %c0_i32, %c0_i32_0 : i32, i32
  }
  func.func @transform_3(%arg0: i32) -> (i32, i32) {
    %c0_i32 = arith.constant 0 : i32
    %c0_i32_0 = arith.constant 0 : i32
    %c0_i32_1 = arith.constant 0 : i32
    return %c0_i32, %c0_i32_0 : i32, i32
  }
  func.func @transform_4(%arg0: i32) -> (i32, i32) {
    %c0_i32 = arith.constant 0 : i32
    %c0_i32_0 = arith.constant 0 : i32
    %c0_i32_1 = arith.constant 0 : i32
    return %c0_i32, %c0_i32_0 : i32, i32
  }
  func.func @transform_5(%arg0: i32) -> (i32, i32) {
    %c0_i32 = arith.constant 0 : i32
    %c0_i32_0 = arith.constant 0 : i32
    %c0_i32_1 = arith.constant 0 : i32
    return %c0_i32, %c0_i32_0 : i32, i32
  }
  func.func @transform_6(%arg0: i32) -> (i32, i32) {
    %c0_i32 = arith.constant 0 : i32
    %c0_i32_0 = arith.constant 0 : i32
    %c0_i32_1 = arith.constant 0 : i32
    return %c0_i32, %c0_i32_0 : i32, i32
  }
  func.func @transform_7(%arg0: i32) -> (i32, i32) {
    %c0_i32 = arith.constant 0 : i32
    %c0_i32_0 = arith.constant 0 : i32
    return %arg0, %c0_i32 : i32, i32
  }
}

</mosaic_0001>

<llo_original>
// kernel: tpu_custom_call.1
$region0: #{tpu_custom_call.1}
  #allocation0 [shape = 'u32[]', space=smem, size = 0x4, offset = 0x4, fixed_abs, tag = 'smem constant byte address 0x4 - core index']
  #allocation1 [shape = 'u32[72,128]{1,0:T(1,128)}', space=vmem, size = 0x9000, scoped, tag = 'internal scratch']
  %s0 = inlined_call_operand.vmem [shape: bf16[64,16], index: 0, kind: input, shape index: {}]
  %s1 = inlined_call_operand.vmem [shape: bf16[16,32], index: 1, kind: input, shape index: {}]
  %s2 = inlined_call_operand.vmem [shape: f32[1,32], index: 2, kind: input, shape index: {}]
  %s3 = inlined_call_operand.vmem [shape: bf16[32,32], index: 3, kind: input, shape index: {}]
  %s4 = inlined_call_operand.vmem [shape: f32[1,32], index: 4, kind: input, shape index: {}]
  %s5 = inlined_call_operand.vmem [shape: bf16[32,128], index: 5, kind: input, shape index: {}]
  %s6 = inlined_call_operand.vmem [shape: f32[1,128], index: 6, kind: input, shape index: {}]
  %s7 = inlined_call_operand.hbm [shape: f32[64,128], index: 7, kind: output, shape index: {}]
  %s8 = sld [smem:[#allocation0]]
  $region61: #{tpu_custom_call.1} parent=0
    _
  %s10 = ssub.s32 1, %s8
  %s11 = scalar_select 0, %s10, %s8
  $region1: #{tpu_custom_call.1} parent=0
    #allocation2 [shape = 'u8[32768]{0}', space=vmem, size = 0x8000, scoped, tag = 'output window, operand 0']
    #allocation3 [shape = 's32[2]{0}', space=sflag, size = 0x8, scoped, tag = 'scoped memory for tpu_custom_call.1']
    %12 = vsyncpa [#allocation3], 0
    %s13 = scalar_lea.sflag [#allocation3], 1
    %14 = vsyncpa %s13, 0
    loop: start=0, step=1, limit=4
    $region2: #{tpu_custom_call.1} parent=1 // loop_pre_header
      _
    $region3: #{tpu_custom_call.1} parent=1 // loop_header
      %s16 = sphi 0, %s20
      %p17 = scmp.ge.s32.totalorder %s16, 4
      %s26 = sphi 0, %s28
      %s29 = sphi 0, %s26
      %s30 = sphi 0, %s29
      %s46 = sphi 0, %s30
      %s50 = sphi 0, %s50
      %s52 = sphi 0, %s50
      %s53 = sphi 0, %s52
      %s67 = sphi 0, %s53
      %s71 = sphi 0, %s71
      %s73 = sphi 0, %s71
      %s74 = sphi 0, %s73
      %s88 = sphi 0, %s74
      %s92 = sphi 0, %s92
      %s94 = sphi 0, %s92
      %s95 = sphi 0, %s94
      %s109 = sphi 0, %s95
      %s113 = sphi 0, %s113
      %s115 = sphi 0, %s113
      %s116 = sphi 0, %s115
      %s130 = sphi 0, %s116
      %s134 = sphi 0, %s134
      %s136 = sphi 0, %s134
      %s137 = sphi 0, %s136
      %s151 = sphi 0, %s137
      %s155 = sphi 0, %s155
      %s157 = sphi 0, %s155
      %s158 = sphi 0, %s157
      %s172 = sphi 0, %s158
      %s178 = sphi 0, %s180
      %s181 = sphi 0, %s178
      %s182 = sphi 0, %s181
      %s198 = sphi 0, %s182
    $region4: #{tpu_custom_call.1} parent=1 // loop_header_branch
      %19 = sbr.rel (%p17) target = $region8
    $region5: #{tpu_custom_call.1} parent=1 // loop_body
      %s21 = ssub.s32 %s16, 1
      %s22 = ssub.s32 %s16, 2
      %s23 = sadd.s32 %s16, 1
      %s24 = ssub.s32 %s16, %s23
      %p25 = scmp.eq.s32.totalorder %s24, 0
      %s27 = sadd.s32 %s26, 1
      %s28 = scalar_select %p25, %s26, %s27
      %p31 = pneg %p25
      %p32 = scmp.eq.s32.totalorder %s16, 1
      %p33 = por %p31, %p32
      %p34 = scmp.ne.s32.totalorder %s26, %s29
      %p35 = scmp.eq.s32.totalorder %s16, 0
      %p36 = por %p34, %p35
      %p37 = scmp.ne.s32.totalorder %s26, %s29
      %p38 = scmp.eq.s32.totalorder %s21, 1
      %p39 = por %p37, %p38
      %p40 = scmp.ne.s32.totalorder %s29, %s30
      %p41 = scmp.eq.s32.totalorder %s21, 0
      %p42 = por %p40, %p41
      %p43 = scmp.ne.s32.totalorder %s29, %s30
      %p44 = scmp.eq.s32.totalorder %s22, 1
      %p45 = por %p43, %p44
      %p47 = scmp.ne.s32.totalorder %s30, %s46
      %p48 = scmp.eq.s32.totalorder %s22, 0
      %p49 = por %p47, %p48
      %s51 = sadd.s32 %s50, 1
      %p54 = scmp.eq.s32.totalorder %s16, 1
      %p55 = scmp.ne.s32.totalorder %s50, %s52
      %p56 = scmp.eq.s32.totalorder %s16, 0
      %p57 = por %p55, %p56
      %p58 = scmp.ne.s32.totalorder %s50, %s52
      %p59 = scmp.eq.s32.totalorder %s21, 1
      %p60 = por %p58, %p59
      %p61 = scmp.ne.s32.totalorder %s52, %s53
      %p62 = scmp.eq.s32.totalorder %s21, 0
      %p63 = por %p61, %p62
      %p64 = scmp.ne.s32.totalorder %s52, %s53
      %p65 = scmp.eq.s32.totalorder %s22, 1
      %p66 = por %p64, %p65
      %p68 = scmp.ne.s32.totalorder %s53, %s67
      %p69 = scmp.eq.s32.totalorder %s22, 0
      %p70 = por %p68, %p69
      %s72 = sadd.s32 %s71, 1
      %p75 = scmp.eq.s32.totalorder %s16, 1
      %p76 = scmp.ne.s32.totalorder %s71, %s73
      %p77 = scmp.eq.s32.totalorder %s16, 0
      %p78 = por %p76, %p77
      %p79 = scmp.ne.s32.totalorder %s71, %s73
      %p80 = scmp.eq.s32.totalorder %s21, 1
      %p81 = por %p79, %p80
      %p82 = scmp.ne.s32.totalorder %s73, %s74
      %p83 = scmp.eq.s32.totalorder %s21, 0
      %p84 = por %p82, %p83
      %p85 = scmp.ne.s32.totalorder %s73, %s74
      %p86 = scmp.eq.s32.totalorder %s22, 1
      %p87 = por %p85, %p86
      %p89 = scmp.ne.s32.totalorder %s74, %s88
      %p90 = scmp.eq.s32.totalorder %s22, 0
      %p91 = por %p89, %p90
      %s93 = sadd.s32 %s92, 1
      %p96 = scmp.eq.s32.totalorder %s16, 1
      %p97 = scmp.ne.s32.totalorder %s92, %s94
      %p98 = scmp.eq.s32.totalorder %s16, 0
      %p99 = por %p97, %p98
      %p100 = scmp.ne.s32.totalorder %s92, %s94
      %p101 = scmp.eq.s32.totalorder %s21, 1
      %p102 = por %p100, %p101
      %p103 = scmp.ne.s32.totalorder %s94, %s95
      %p104 = scmp.eq.s32.totalorder %s21, 0
      %p105 = por %p103, %p104
      %p106 = scmp.ne.s32.totalorder %s94, %s95
      %p107 = scmp.eq.s32.totalorder %s22, 1
      %p108 = por %p106, %p107
      %p110 = scmp.ne.s32.totalorder %s95, %s109
      %p111 = scmp.eq.s32.totalorder %s22, 0
      %p112 = por %p110, %p111
      %s114 = sadd.s32 %s113, 1
      %p117 = scmp.eq.s32.totalorder %s16, 1
      %p118 = scmp.ne.s32.totalorder %s113, %s115
      %p119 = scmp.eq.s32.totalorder %s16, 0
      %p120 = por %p118, %p119
      %p121 = scmp.ne.s32.totalorder %s113, %s115
      %p122 = scmp.eq.s32.totalorder %s21, 1
      %p123 = por %p121, %p122
      %p124 = scmp.ne.s32.totalorder %s115, %s116
      %p125 = scmp.eq.s32.totalorder %s21, 0
      %p126 = por %p124, %p125
      %p127 = scmp.ne.s32.totalorder %s115, %s116
      %p128 = scmp.eq.s32.totalorder %s22, 1
      %p129 = por %p127, %p128
      %p131 = scmp.ne.s32.totalorder %s116, %s130
      %p132 = scmp.eq.s32.totalorder %s22, 0
      %p133 = por %p131, %p132
      %s135 = sadd.s32 %s134, 1
      %p138 = scmp.eq.s32.totalorder %s16, 1
      %p139 = scmp.ne.s32.totalorder %s134, %s136
      %p140 = scmp.eq.s32.totalorder %s16, 0
      %p141 = por %p139, %p140
      %p142 = scmp.ne.s32.totalorder %s134, %s136
      %p143 = scmp.eq.s32.totalorder %s21, 1
      %p144 = por %p142, %p143
      %p145 = scmp.ne.s32.totalorder %s136, %s137
      %p146 = scmp.eq.s32.totalorder %s21, 0
      %p147 = por %p145, %p146
      %p148 = scmp.ne.s32.totalorder %s136, %s137
      %p149 = scmp.eq.s32.totalorder %s22, 1
      %p150 = por %p148, %p149
      %p152 = scmp.ne.s32.totalorder %s137, %s151
      %p153 = scmp.eq.s32.totalorder %s22, 0
      %p154 = por %p152, %p153
      %s156 = sadd.s32 %s155, 1
      %p159 = scmp.eq.s32.totalorder %s16, 1
      %p160 = scmp.ne.s32.totalorder %s155, %s157
      %p161 = scmp.eq.s32.totalorder %s16, 0
      %p162 = por %p160, %p161
      %p163 = scmp.ne.s32.totalorder %s155, %s157
      %p164 = scmp.eq.s32.totalorder %s21, 1
      %p165 = por %p163, %p164
      %p166 = scmp.ne.s32.totalorder %s157, %s158
      %p167 = scmp.eq.s32.totalorder %s21, 0
      %p168 = por %p166, %p167
      %p169 = scmp.ne.s32.totalorder %s157, %s158
      %p170 = scmp.eq.s32.totalorder %s22, 1
      %p171 = por %p169, %p170
      %p173 = scmp.ne.s32.totalorder %s158, %s172
      %p174 = scmp.eq.s32.totalorder %s22, 0
      %p175 = por %p173, %p174
      %s176 = ssub.s32 %s16, %s23
      %p177 = scmp.eq.s32.totalorder %s176, 0
      %s179 = sadd.s32 %s178, 1
      %s180 = scalar_select %p177, %s178, %s179
      %p183 = pneg %p177
      %p184 = scmp.eq.s32.totalorder %s16, 1
      %p185 = por %p183, %p184
      %p186 = scmp.ne.s32.totalorder %s178, %s181
      %p187 = scmp.eq.s32.totalorder %s16, 0
      %p188 = por %p186, %p187
      %p189 = scmp.ne.s32.totalorder %s178, %s181
      %p190 = scmp.eq.s32.totalorder %s21, 1
      %p191 = por %p189, %p190
      %p192 = scmp.ne.s32.totalorder %s181, %s182
      %p193 = scmp.eq.s32.totalorder %s21, 0
      %p194 = por %p192, %p193
      %p195 = scmp.ne.s32.totalorder %s181, %s182
      %p196 = scmp.eq.s32.totalorder %s22, 1
      %p197 = por %p195, %p196
      %p199 = scmp.ne.s32.totalorder %s182, %s198
      %p200 = scmp.eq.s32.totalorder %s22, 0
      %p201 = por %p199, %p200
      %p202 = scmp.le.s32.totalorder 1, %s16
      %p203 = scmp.lt.s32.totalorder %s16, 3
      %p204 = pnand %p202, %p203
      %p205 = pneg %p204
      // Predicated region
      $region9: #{tpu_custom_call.1} parent=5 // pred_check
        _
      $region10: #{tpu_custom_call.1} parent=5 // pred_check_branch
        %207 = sbr.rel (%p204) target = $region12
      $region11: #{tpu_custom_call.1} parent=5 // pred_region
        %s208 = ssub.s32 %s16, 1
        // Predicated region
        $region13: #{tpu_custom_call.1} parent=11 // pred_check
          %p209 = pneg %p63
        $region14: #{tpu_custom_call.1} parent=11 // pred_check_branch
          %211 = sbr.rel (%p209) target = $region16
        $region15: #{tpu_custom_call.1} parent=11 // pred_region
          _
        $region16: #{tpu_custom_call.1} parent=11 // pred_fallthru
          _
        // Predicated region
        $region17: #{tpu_custom_call.1} parent=11 // pred_check
          %p212 = pneg %p84
        $region18: #{tpu_custom_call.1} parent=11 // pred_check_branch
          %214 = sbr.rel (%p212) target = $region20
        $region19: #{tpu_custom_call.1} parent=11 // pred_region
          _
        $region20: #{tpu_custom_call.1} parent=11 // pred_fallthru
          _
        // Predicated region
        $region21: #{tpu_custom_call.1} parent=11 // pred_check
          %p215 = pneg %p105
        $region22: #{tpu_custom_call.1} parent=11 // pred_check_branch
          %217 = sbr.rel (%p215) target = $region24
        $region23: #{tpu_custom_call.1} parent=11 // pred_region
          _
        $region24: #{tpu_custom_call.1} parent=11 // pred_fallthru
          _
        // Predicated region
        $region25: #{tpu_custom_call.1} parent=11 // pred_check
          %p218 = pneg %p126
        $region26: #{tpu_custom_call.1} parent=11 // pred_check_branch
          %220 = sbr.rel (%p218) target = $region28
        $region27: #{tpu_custom_call.1} parent=11 // pred_region
          _
        $region28: #{tpu_custom_call.1} parent=11 // pred_fallthru
          _
        // Predicated region
        $region29: #{tpu_custom_call.1} parent=11 // pred_check
          %p221 = pneg %p147
        $region30: #{tpu_custom_call.1} parent=11 // pred_check_branch
          %223 = sbr.rel (%p221) target = $region32
        $region31: #{tpu_custom_call.1} parent=11 // pred_region
          _
        $region32: #{tpu_custom_call.1} parent=11 // pred_fallthru
          _
        // Predicated region
        $region33: #{tpu_custom_call.1} parent=11 // pred_check
          %p224 = pneg %p168
        $region34: #{tpu_custom_call.1} parent=11 // pred_check_branch
          %226 = sbr.rel (%p224) target = $region36
        $region35: #{tpu_custom_call.1} parent=11 // pred_region
          _
        $region36: #{tpu_custom_call.1} parent=11 // pred_fallthru
          _
      $region12: #{tpu_custom_call.1} parent=5 // pred_fallthru
        _
      %p227 = scmp.lt.s32.totalorder %s16, 2
      // Predicated region
      $region37: #{tpu_custom_call.1} parent=5 // pred_check
        %p228 = pneg %p227
      $region38: #{tpu_custom_call.1} parent=5 // pred_check_branch
        %230 = sbr.rel (%p228) target = $region40
      $region39: #{tpu_custom_call.1} parent=5 // pred_region
        // Predicated region
        $region41: #{tpu_custom_call.1} parent=39 // pred_check
          %p231 = pneg %p36
        $region42: #{tpu_custom_call.1} parent=39 // pred_check_branch
          %233 = sbr.rel (%p231) target = $region44
        $region43: #{tpu_custom_call.1} parent=39 // pred_region
          %s234 = smul.u32 4, %s16
          %p235 = scmp.lt.s32.totalorder %s234, 7
          %s236 = scalar_select %p235, %s234, 7
          %s237 = smul.addr %s236, 4
          %s238 = scalar_lea.vmem %s0, %s237
          %s239 = smul.u32 4, %s16
        $region44: #{tpu_custom_call.1} parent=39 // pred_fallthru
          _
      $region40: #{tpu_custom_call.1} parent=5 // pred_fallthru
        _
      %p240 = scmp.le.s32.totalorder 1, %s16
      %p241 = scmp.lt.s32.totalorder %s16, 3
      %p242 = pnand %p240, %p241
      %p243 = pneg %p242
      // Predicated region
      $region45: #{tpu_custom_call.1} parent=5 // pred_check
        _
      $region46: #{tpu_custom_call.1} parent=5 // pred_check_branch
        %245 = sbr.rel (%p242) target = $region48
      $region47: #{tpu_custom_call.1} parent=5 // pred_region
        %s246 = ssub.s32 %s16, 1
        %s247 = smul.u32 4, %s21
        %p248 = scmp.lt.s32.totalorder %s247, 7
        %s249 = scalar_select %p248, %s247, 7
        %s250 = smul.addr %s249, 4
        %s251 = scalar_lea.vmem %s0, %s250
        %p252 = pneg %p42
        %p253 = pneg %p39
        %p254 = pneg %p63
        %p255 = pneg %p60
        %p256 = pneg %p84
        %p257 = pneg %p81
        %p258 = pneg %p105
        %p259 = pneg %p102
        %p260 = pneg %p126
        %p261 = pneg %p123
        %p262 = pneg %p147
        %p263 = pneg %p144
        %p264 = pneg %p168
        %p265 = pneg %p165
        %p266 = pneg %p194
        %p267 = pneg %p191
        %s268 = sand.u32 %s181, 1
        %s269 = scalar_lea.sflag [#allocation3], %s268
        %s270 = sand.u32 %s181, 1
        %s271 = smul.addr %s270, 32
        %s272 = scalar_lea.vmem [#allocation2], %s271
        %s273 = smul.u32 4, %s21
        %p274 = scmp.lt.s32.totalorder %s273, 7
        %s275 = scalar_select %p274, %s273, 7
        %s276 = smul.addr %s275, 4
        %s277 = scalar_lea.vmem %s0, %s276
        %s278 = smul.u32 4, %s21
        %s279 = smul.u32 4, %s21
        %v281 = vld [vmem:[%s277] sm:$0xf]
        %v282 = vld [vmem:[%s277 + $0x4] sm:$0xf]
        %v283 = vld [vmem:[%s277 + $0x8] sm:$0xf]
        %v284 = vld [vmem:[%s277 + $0xc] sm:$0xf]
        %v285 = vld [vmem:[%s1] sm:$0xf]
        %v286 = vld [vmem:[%s1 + $0x4] sm:$0xf]
        %v287 = vld [vmem:[%s2] sm:$0x1]
        %v289 = vperm.slane %v287, 0
        %v295 = vunpack.c.l.b16 %v281
        %v296 = vunpack.c.l.b16 %v282
        %v297 = vunpack.c.l.b16 %v283
        %v298 = vunpack.c.l.b16 %v284
        %v299 = vpack.c.b16 %v296, %v295
        %v300 = vpack.c.b16 %v298, %v297
        %v303 = vunpack.c.l.b16 %v285
        %v304 = vunpack.c.l.b16 %v286
        %v305 = vpack.c.b16 %v304, %v303
        %vm307 = vcmask 130048
        %v309 = vsel %vm307, %v299, 0
        %v312 = vsel %vm307, %v300, 0
        %314 = vmatpush.bf16.msra.mxu0 0
        %315 = vmatpush.bf16.msra.mxu0 0
        %316 = vmatpush.bf16.msra.mxu0 0
        %317 = vmatpush.bf16.msra.mxu0 0
        %318 = vmatpush.bf16.msra.mxu0 0
        %319 = vmatpush.bf16.msra.mxu0 0
        %320 = vmatpush.bf16.msra.mxu0 0
        %321 = vmatpush.bf16.msra.mxu0 %v305
        %322 = vmatmul.bf16.gmra.mxu0 %v309
        %v323 = vpop.f32.mrf.mxu0
        %v324 = vadd.f32 %v289, %v323
        %v325 = vpop.f32.mrf.mxu0
        %v326 = vadd.f32 %v289, %v325
        %327 = vmatmul.bf16.gmra.mxu0 %v312
        %v328 = vpop.f32.mrf.mxu0
        %v329 = vadd.f32 %v289, %v328
        %v330 = vpop.f32.mrf.mxu0
        %v331 = vadd.f32 %v289, %v330
        %332 = vdwg.mxu0
        %v333 = vmax.f32 %v324, 0.0
        %v334 = vmax.f32 %v326, 0.0
        %v335 = vmax.f32 %v329, 0.0
        %v336 = vmax.f32 %v331, 0.0
        %v337 = vpack.c.bf16 %v334, %v333
        %v338 = vpack.c.bf16 %v336, %v335
        %v339 = vld [vmem:[%s3] sm:$0xf]
        %v340 = vld [vmem:[%s3 + $0x4] sm:$0xf]
        %v341 = vld [vmem:[%s3 + $0x8] sm:$0xf]
        %v342 = vld [vmem:[%s3 + $0xc] sm:$0xf]
        %v343 = vld [vmem:[%s4] sm:$0x1]
        %v345 = vperm.slane %v343, 0
        %v351 = vunpack.c.l.b16 %v339
        %v352 = vunpack.c.l.b16 %v340
        %v353 = vunpack.c.l.b16 %v341
        %v354 = vunpack.c.l.b16 %v342
        %v355 = vpack.c.b16 %v352, %v351
        %v356 = vpack.c.b16 %v354, %v353
        %vm359 = vcmask 261120
        %v361 = vsel %vm359, %v337, 0
        %v364 = vsel %vm359, %v338, 0
        %366 = vmatpush.bf16.msra.mxu0 0
        %367 = vmatpush.bf16.msra.mxu0 0
        %368 = vmatpush.bf16.msra.mxu0 0
        %369 = vmatpush.bf16.msra.mxu0 0
        %370 = vmatpush.bf16.msra.mxu0 0
        %371 = vmatpush.bf16.msra.mxu0 0
        %372 = vmatpush.bf16.msra.mxu0 %v356
        %373 = vmatpush.bf16.msra.mxu0 %v355
        %374 = vmatmul.bf16.gmra.mxu0 %v361
        %v375 = vpop.f32.mrf.mxu0
        %v376 = vadd.f32 %v345, %v375
        %v377 = vpop.f32.mrf.mxu0
        %v378 = vadd.f32 %v345, %v377
        %379 = vmatmul.bf16.gmra.mxu0 %v364
        %v380 = vpop.f32.mrf.mxu0
        %v381 = vadd.f32 %v345, %v380
        %v382 = vpop.f32.mrf.mxu0
        %v383 = vadd.f32 %v345, %v382
        %384 = vdwg.mxu0
        %v385 = vmax.f32 %v376, 0.0
        %v386 = vmax.f32 %v378, 0.0
        %v387 = vmax.f32 %v381, 0.0
        %v388 = vmax.f32 %v383, 0.0
        %v389 = vpack.c.bf16 %v386, %v385
        %v390 = vpack.c.bf16 %v388, %v387
        %v391 = vld [vmem:[%s5] sm:$0xf]
        %v392 = vld [vmem:[%s5 + $0x4] sm:$0xf]
        %v393 = vld [vmem:[%s5 + $0x8] sm:$0xf]
        %v394 = vld [vmem:[%s5 + $0xc] sm:$0xf]
        %v395 = vld [vmem:[%s6] sm:$0x1]
        %v397 = vperm.slane %v395, 0
        %v403 = vunpack.c.l.b16 %v391
        %v404 = vunpack.c.l.b16 %v392
        %v405 = vunpack.c.l.b16 %v393
        %v406 = vunpack.c.l.b16 %v394
        %v407 = vpack.c.b16 %v404, %v403
        %v408 = vpack.c.b16 %v406, %v405
        %v412 = vsel %vm359, %v389, 0
        %v415 = vsel %vm359, %v390, 0
        %417 = vmatpush.bf16.msra.mxu0 0
        %418 = vmatpush.bf16.msra.mxu0 0
        %419 = vmatpush.bf16.msra.mxu0 0
        %420 = vmatpush.bf16.msra.mxu0 0
        %421 = vmatpush.bf16.msra.mxu0 0
        %422 = vmatpush.bf16.msra.mxu0 0
        %423 = vmatpush.bf16.msra.mxu0 %v408
        %424 = vmatpush.bf16.msra.mxu0 %v407
        %425 = vmatmul.bf16.gmra.mxu0 %v412
        %v426 = vpop.f32.mrf.mxu0
        %v427 = vadd.f32 %v397, %v426
        %v428 = vpop.f32.mrf.mxu0
        %v429 = vadd.f32 %v397, %v428
        %430 = vmatmul.bf16.gmra.mxu0 %v415
        %v431 = vpop.f32.mrf.mxu0
        %v432 = vadd.f32 %v397, %v431
        %v433 = vpop.f32.mrf.mxu0
        %v434 = vadd.f32 %v397, %v433
        %435 = vdwg.mxu0
        %436 = vst [vmem:[%s272] sm:$0xff] %v427
        %437 = vst [vmem:[%s272 + $0x8] sm:$0xff] %v429
        %438 = vst [vmem:[%s272 + $0x10] sm:$0xff] %v432
        %439 = vst [vmem:[%s272 + $0x18] sm:$0xff] %v434
        %s440 = sand.u32 %s181, 1
        %s441 = scalar_lea.sflag [#allocation3], %s440
        %s442 = sand.u32 %s181, 1
        %s443 = smul.addr %s442, 32
        %s444 = scalar_lea.vmem [#allocation2], %s443
        // Predicated region
        $region49: #{tpu_custom_call.1} parent=47 // pred_check
          %p445 = pneg %p191
        $region50: #{tpu_custom_call.1} parent=47 // pred_check_branch
          %447 = sbr.rel (%p445) target = $region52
        $region51: #{tpu_custom_call.1} parent=47 // pred_region
          %s448 = smul.u32 4, %s21
          %450 = vsyncadd %s441, 0
          %s451 = smul.addr %s448, 8
          %s452 = scalar_lea.hbm %s7, %s451
          %s453 = sshll.u32 %s444, 4
          %s454 = int_to_ptr.vmem [resolvable:$true] %s453
          %s455 = sshll.u32 %s452, 4
          %s456 = int_to_ptr.hbm [resolvable:$true] %s455
          %461 = dma.vmem_to_hbm [thread:$0]  %s454, 512, %s456, %s441, 128, 128, 8
        $region52: #{tpu_custom_call.1} parent=47 // pred_fallthru
          _
      $region48: #{tpu_custom_call.1} parent=5 // pred_fallthru
        _
      %p462 = scmp.le.s32.totalorder 2, %s16
      // Predicated region
      $region53: #{tpu_custom_call.1} parent=5 // pred_check
        %p463 = pneg %p462
      $region54: #{tpu_custom_call.1} parent=5 // pred_check_branch
        %465 = sbr.rel (%p463) target = $region56
      $region55: #{tpu_custom_call.1} parent=5 // pred_region
        %s466 = ssub.s32 %s16, 2
        // Predicated region
        $region57: #{tpu_custom_call.1} parent=55 // pred_check
          %p467 = pneg %p197
        $region58: #{tpu_custom_call.1} parent=55 // pred_check_branch
          %469 = sbr.rel (%p467) target = $region60
        $region59: #{tpu_custom_call.1} parent=55 // pred_region
          %s470 = sand.u32 %s182, 1
          %s471 = scalar_lea.sflag [#allocation3], %s470
          %s472 = sand.u32 %s182, 1
          %s473 = smul.addr %s472, 32
          %s474 = scalar_lea.vmem [#allocation2], %s473
          %476 = dma.done %s471, 512
        $region60: #{tpu_custom_call.1} parent=55 // pred_fallthru
          _
      $region56: #{tpu_custom_call.1} parent=5 // pred_fallthru
        _
    $region6: #{tpu_custom_call.1} parent=1 // loop_footer
      %s20 = sadd.s32 1, %s16
    $region7: #{tpu_custom_call.1} parent=1 // loop_footer_branch
      %15 = sbr.rel target = $region3
    $region8: #{tpu_custom_call.1} parent=1 // loop_exit
      _
    %477 = vsyncpa [#allocation3], 1
    %s478 = scalar_lea.sflag [#allocation3], 1
    %479 = vsyncpa %s478, 1

</llo_original>
